<compile_context>
chip_gen: v7x
topology: tpu7x:2x2x1
jax: 0.10.0
libtpu: 0.0.40
codegen_flags: <defaults>
</compile_context>

<pallas_src>
import functools

import jax
import jax.numpy as jnp
from jax.experimental import pallas as pl
from jax.experimental.pallas import tpu as pltpu

_ON_TPU = jax.default_backend() == "tpu"


def _ru(x, m):
    return (int(x) + m - 1) // m * m


# ---------------------------------------------------------------------------
# Kernel 1: SpAdjDropEdge
# ---------------------------------------------------------------------------
LANE_WIDTH = 1024       # lane-dense last dim (multiple of 128) -> unmasked vld/vst
MAX_BLOCK_ROWS = 512    # 512 x 1024 x 4 B = 2 MiB f32 per block (~85% HBM roofline)


def _dropedge_kernel(seed_ref, vals_ref, newvals_ref, *mask_ref,
                     inv_keep_rate, threshold):
    # Per-block independent stream from the hardware PRNG (no HBM bits stream).
    pltpu.prng_seed(seed_ref[0], pl.program_id(0))
    bits = pltpu.bitcast(pltpu.prng_random_bits(vals_ref.shape), jnp.uint32)
    # keep with prob keepRate:  bits >= (1 - keepRate) * 2^32  (single uint compare)
    keep = bits >= jnp.uint32(threshold)
    scaled = vals_ref[...] * jnp.float32(inv_keep_rate)
    newvals_ref[...] = jnp.where(keep, scaled, jnp.zeros_like(scaled))
    if mask_ref:                                   # optional second output
        mask_ref[0][...] = keep.astype(jnp.int8)


def sp_adj_drop_edge(idxs, vals, keep_rate, key, *, return_mask=False):
    """Pallas SpAdjDropEdge.forward.

    Returns (idxs, new_vals[, mask]); dropped edges have value 0 (indices kept).
    Dense reconstruction matches the PyTorch sparse result.
    """
    keep_rate = float(keep_rate)
    E = int(vals.shape[0])
    if keep_rate >= 1.0:
        if return_mask:
            return idxs, vals, jnp.ones((E,), bool)
        return idxs, vals

    if not _ON_TPU:
        # TODO(synk): the TPU hardware PRNG has no CPU/interpret lowering; keep a
        # plain-jnp fallback only for non-TPU backends.
        keep = jax.random.uniform(key, (E,)) >= (1.0 - keep_rate)
        new_vals = jnp.where(keep, vals / keep_rate, 0.0)
        return (idxs, new_vals, keep) if return_mask else (idxs, new_vals)

    W = LANE_WIDTH
    rows = (E + W - 1) // W
    block_rows = min(MAX_BLOCK_ROWS, _ru(rows, 8))   # >= 8 sublanes, multiple of 8
    rows_pad = _ru(rows, block_rows)
    E_pad = rows_pad * W

    # Single pad/reshape to the lane-dense 2-D layout.
    vals_p = jnp.pad(vals.astype(jnp.float32), (0, E_pad - E)).reshape(rows_pad, W)
    seed = jax.random.randint(key, (1,), 0, jnp.iinfo(jnp.int32).max,
                              dtype=jnp.int32)

    threshold = min(int(round((1.0 - keep_rate) * 2.0 ** 32)), 2 ** 32 - 1)
    kernel = functools.partial(_dropedge_kernel,
                               inv_keep_rate=1.0 / keep_rate,
                               threshold=threshold)

    blk = pl.BlockSpec((block_rows, W), lambda i: (i, 0))
    seed_spec = pl.BlockSpec(memory_space=pltpu.MemorySpace.SMEM)
    out_shape = [jax.ShapeDtypeStruct((rows_pad, W), jnp.float32)]
    out_specs = [blk]
    if return_mask:
        out_shape.append(jax.ShapeDtypeStruct((rows_pad, W), jnp.int8))
        out_specs.append(blk)

    res = pl.pallas_call(
        kernel,
        out_shape=tuple(out_shape),
        grid=(rows_pad // block_rows,),
        in_specs=[seed_spec, blk],
        out_specs=tuple(out_specs),
        input_output_aliases={1: 0},          # reuse padded vals buffer for new_vals
        compiler_params=pltpu.CompilerParams(
            dimension_semantics=("arbitrary",),   # HBM-bound; no TC-sharding benefit
            vmem_limit_bytes=32 * 1024 * 1024,
        ),
    )(seed, vals_p)

    new_vals = res[0].reshape(-1)[:E]
    if return_mask:
        return idxs, new_vals, res[1].reshape(-1)[:E].astype(bool)
    return idxs, new_vals


# ---------------------------------------------------------------------------
# Kernel 2: GCNLayer   LeakyReLU(adj @ embeds)
# ---------------------------------------------------------------------------
def _gcn_kernel(kidx_ref, kcnt_ref, adj_ref, emb_ref, out_ref, acc_ref, *, leaky):
    i, k = pl.program_id(0), pl.program_id(2)

    @pl.when(k == 0)
    def _init():
        acc_ref[...] = jnp.zeros_like(acc_ref)

    @pl.when(k < kcnt_ref[i])       # skip MXU work for padded / empty K blocks
    def _accum():
        acc_ref[...] += jnp.dot(adj_ref[...], emb_ref[...],
                                preferred_element_type=jnp.float32)

    @pl.when(k == pl.num_programs(2) - 1)
    def _finalize():
        x = acc_ref[...]
        out_ref[...] = jnp.where(x >= 0.0, x, jnp.float32(leaky) * x)


def gcn_layer(idxs, vals, shape, embeds, leaky, *, tm=256, tn=256, tk=512):
    """LeakyReLU(A @ E) for a COO adjacency (bf16 MXU matmul, f32 accumulation)."""
    M, K = int(shape[0]), int(shape[1])
    D = int(embeds.shape[1])
    tm = min(tm, _ru(M, 16))        # bf16 sublane multiple
    tk = min(tk, _ru(K, 128))       # lane multiple (adj last dim / emb first dim)
    tn = min(tn, _ru(D, 128))
    Mp, Kp, Dp = _ru(M, tm), _ru(K, tk), _ru(D, tn)
    Mt, Kt, Nt = Mp // tm, Kp // tk, Dp // tn

    rows, cols = idxs[0], idxs[1]
    # Densify directly in bf16 (halves the O(M*K) HBM writeback vs f32-then-cast).
    # TODO(synk): a true sparse SpMM (scatter-add over COO edges) has no clean
    # static-shape Pallas equivalent; the scatter densification stays in plain JAX.
    adj_p = jnp.zeros((Mp, Kp), jnp.bfloat16).at[rows, cols].add(
        vals.astype(jnp.bfloat16))
    emb_p = jnp.zeros((Kp, Dp), jnp.bfloat16).at[:K, :D].set(
        embeds.astype(jnp.bfloat16))

    # Block-sparse schedule: per row-tile, the (sorted) list of K tiles containing
    # at least one edge, padded with 0.  Indices do not change across GNN layers,
    # only values do, so this could be hoisted out of the layer loop.
    blk_nnz = jnp.zeros((Mt, Kt), jnp.int32).at[rows // tm, cols // tk].add(1)
    has = blk_nnz > 0
    counts = has.sum(axis=1).astype(jnp.int32)
    max_k = max(int(jnp.max(counts)), 1)
    order = jnp.argsort(jnp.where(has, 0, 1), axis=1, stable=True).astype(jnp.int32)
    kidx = jnp.where(jnp.arange(Kt, dtype=jnp.int32)[None, :] < counts[:, None],
                     order, 0)[:, :max_k]

    grid_spec = pltpu.PrefetchScalarGridSpec(
        num_scalar_prefetch=2,
        grid=(Mt, Nt, max_k),
        in_specs=[
            pl.BlockSpec((tm, tk), lambda i, j, k, kidx, kcnt: (i, kidx[i, k])),
            pl.BlockSpec((tk, tn), lambda i, j, k, kidx, kcnt: (kidx[i, k], j)),
        ],
        out_specs=pl.BlockSpec((tm, tn), lambda i, j, k, kidx, kcnt: (i, j)),
        scratch_shapes=[pltpu.VMEM((tm, tn), jnp.float32)],
    )
    out_p = pl.pallas_call(
        functools.partial(_gcn_kernel, leaky=float(leaky)),
        out_shape=jax.ShapeDtypeStruct((Mp, Dp), jnp.float32),
        grid_spec=grid_spec,
        compiler_params=pltpu.CompilerParams(
            dimension_semantics=("parallel", "parallel", "arbitrary"),
            vmem_limit_bytes=32 * 1024 * 1024,
        ),
    )(kidx, counts, adj_p, emb_p)
    return out_p[:M, :D]


def coo_to_dense(idxs, vals, shape):
    # f32 densification used only by the pure-jnp reference.
    return jnp.zeros(shape, jnp.float32).at[idxs[0], idxs[1]].add(vals)


# ---------------------------------------------------------------------------
# SocialModel2.forward orchestration (plain JAX around the two kernels)
# ---------------------------------------------------------------------------
def social_model2_forward(params, adj, social_adj, tag_adj, keep_rate, key,
                          *, n_user, n_item, n_tag, gnn_layer, leaky):
    embeds = jnp.concatenate([params["uEmbeds"], params["iEmbeds"]], axis=0)
    tagembeds = jnp.concatenate([params["iEmbeds"], params["tEmbeds"]], axis=0)
    lats = [embeds]
    gnnLats, tagLats, socialLats = [], [tagembeds], []

    for _ in range(gnn_layer):
        key, k1, k2, k3 = jax.random.split(key, 4)

        # main (user+item) bipartite graph
        _, d_val = sp_adj_drop_edge(adj["idxs"], adj["vals"], keep_rate, k1)
        temEmbeds = gcn_layer(adj["idxs"], d_val, adj["shape"], lats[-1], leaky)

        # tag graph on concat(item part of lats, tag part of tagLats)
        _, t_val = sp_adj_drop_edge(tag_adj["idxs"], tag_adj["vals"], keep_rate, k2)
        tag_in = jnp.concatenate([lats[-1][n_user:], tagLats[-1][n_item:]], axis=0)
        tagLat = gcn_layer(tag_adj["idxs"], t_val, tag_adj["shape"], tag_in, leaky)

        # social graph on user part of lats
        _, s_val = sp_adj_drop_edge(social_adj["idxs"], social_adj["vals"],
                                    keep_rate, k3)
        socialULat = gcn_layer(social_adj["idxs"], s_val, social_adj["shape"],
                               lats[-1][:n_user], leaky)

        gnnLats.append(temEmbeds)
        tagLats.append(tagLat)
        socialLats.append(socialULat)

        a = temEmbeds[:n_user] + socialULat
        b = temEmbeds[n_user:] + tagLat[:n_item]
        lats.append(jnp.concatenate([a, b], axis=0))

    return sum(lats), gnnLats, tagLats, socialLats


def _forward_ref(params, adj, social_adj, tag_adj, *, n_user, n_item, n_tag,
                 gnn_layer, leaky):
    """Pure-jnp f32 reference of forward with keepRate == 1.0 (no dropout)."""
    def gcn(a, e):
        x = a @ e
        return jnp.where(x >= 0.0, x, leaky * x)

    adj_d = coo_to_dense(adj["idxs"], adj["vals"], adj["shape"])
    tag_d = coo_to_dense(tag_adj["idxs"], tag_adj["vals"], tag_adj["shape"])
    soc_d = coo_to_dense(social_adj["idxs"], social_adj["vals"], social_adj["shape"])

    embeds = jnp.concatenate([params["uEmbeds"], params["iEmbeds"]], axis=0)
    tagembeds = jnp.concatenate([params["iEmbeds"], params["tEmbeds"]], axis=0)
    lats, tagLats = [embeds], [tagembeds]
    for _ in range(gnn_layer):
        tem = gcn(adj_d, lats[-1])
        tagLat = gcn(tag_d, jnp.concatenate([lats[-1][n_user:],
                                             tagLats[-1][n_item:]], axis=0))
        socialULat = gcn(soc_d, lats[-1][:n_user])
        tagLats.append(tagLat)
        a = tem[:n_user] + socialULat
        b = tem[n_user:] + tagLat[:n_item]
        lats.append(jnp.concatenate([a, b], axis=0))
    return sum(lats)


if __name__ == "__main__":
    root = jax.random.PRNGKey(0)
    n_user, n_item, n_tag, latdim = 32, 64, 32, 128
    gnn_layer, leaky, keep_rate = 2, 0.5, 0.5
    keys = jax.random.split(root, 16)

    def xavier(k, shape):
        bound = (6.0 / (shape[0] + shape[1])) ** 0.5
        return jax.random.uniform(k, shape, jnp.float32, -bound, bound)

    params = {
        "uEmbeds": xavier(keys[0], (n_user, latdim)),
        "iEmbeds": xavier(keys[1], (n_item, latdim)),
        "tEmbeds": xavier(keys[2], (n_tag, latdim)),
    }

    def rand_coo(kr, kc, kv, n_rows, n_cols, n_edges):
        rows = jax.random.randint(kr, (n_edges,), 0, n_rows, dtype=jnp.int32)
        cols = jax.random.randint(kc, (n_edges,), 0, n_cols, dtype=jnp.int32)
        vals = jax.random.uniform(kv, (n_edges,), jnp.float32)
        return {"idxs": jnp.stack([rows, cols], axis=0), "vals": vals,
                "shape": (n_rows, n_cols)}

    n_ui, n_it = n_user + n_item, n_item + n_tag
    adj = rand_coo(keys[3], keys[4], keys[5], n_ui, n_ui, 400)
    tag_adj = rand_coo(keys[6], keys[7], keys[8], n_it, n_it, 300)
    social_adj = rand_coo(keys[9], keys[10], keys[11], n_user, n_user, 150)

    # --- SpAdjDropEdge kernel semantics -----------------------------------
    _, new_vals, mask = sp_adj_drop_edge(adj["idxs"], adj["vals"], keep_rate,
                                         jax.random.PRNGKey(7), return_mask=True)
    jax.block_until_ready((new_vals, mask))
    expected = jnp.where(mask, adj["vals"] / keep_rate, 0.0)
    assert new_vals.shape == adj["vals"].shape
    assert bool(jnp.allclose(new_vals, expected, rtol=1e-6, atol=1e-6))
    frac_kept = float(jnp.mean(mask.astype(jnp.float32)))
    assert 0.25 < frac_kept < 0.75     # ~Bernoulli(0.5) over 400 edges

    # keepRate == 1.0 fast path returns input unchanged.
    _, same_vals = sp_adj_drop_edge(adj["idxs"], adj["vals"], 1.0,
                                    jax.random.PRNGKey(8))
    assert bool(jnp.all(same_vals == adj["vals"]))

    # --- GCN kernel vs plain-JAX reference (bf16 MXU vs f32 ref) ----------
    emb0 = jnp.concatenate([params["uEmbeds"], params["iEmbeds"]], axis=0)
    gcn_out = gcn_layer(adj["idxs"], adj["vals"], adj["shape"], emb0, leaky)
    adj_dense = coo_to_dense(adj["idxs"], adj["vals"], adj["shape"])
    x_ref = adj_dense @ emb0
    gcn_ref = jnp.where(x_ref >= 0.0, x_ref, leaky * x_ref)
    jax.block_until_ready(gcn_out)
    assert bool(jnp.allclose(gcn_out, gcn_ref, rtol=2e-2, atol=2e-2))

    # --- tiled + block-sparse GCN path on a larger, sparser graph ----------
    big = rand_coo(keys[12], keys[13], keys[14], 512, 512, 60)
    big_emb = jax.random.normal(keys[15], (512, latdim), jnp.float32)
    big_out = gcn_layer(big["idxs"], big["vals"], big["shape"], big_emb, leaky,
                        tm=128, tk=128)
    xr = coo_to_dense(big["idxs"], big["vals"], big["shape"]) @ big_emb
    big_ref = jnp.where(xr >= 0.0, xr, leaky * xr)
    jax.block_until_ready(big_out)
    assert bool(jnp.allclose(big_out, big_ref, rtol=2e-2, atol=2e-2))

    # --- full SocialModel2 forward, stochastic path ------------------------
    embeds, gnnLats, tagLats, socialLats = social_model2_forward(
        params, adj, social_adj, tag_adj, keep_rate, jax.random.PRNGKey(42),
        n_user=n_user, n_item=n_item, n_tag=n_tag,
        gnn_layer=gnn_layer, leaky=leaky)
    jax.block_until_ready(embeds)
    assert embeds.shape == (n_ui, latdim)
    assert len(gnnLats) == gnn_layer and len(socialLats) == gnn_layer
    assert len(tagLats) == gnn_layer + 1
    assert bool(jnp.all(jnp.isfinite(embeds)))

    # --- full forward, deterministic (keepRate=1.0) vs f32 reference -------
    embeds_p, _, _, _ = social_model2_forward(
        params, adj, social_adj, tag_adj, 1.0, jax.random.PRNGKey(42),
        n_user=n_user, n_item=n_item, n_tag=n_tag,
        gnn_layer=gnn_layer, leaky=leaky)
    embeds_r = _forward_ref(params, adj, social_adj, tag_adj,
                            n_user=n_user, n_item=n_item, n_tag=n_tag,
                            gnn_layer=gnn_layer, leaky=leaky)
    jax.block_until_ready((embeds_p, embeds_r))
    assert bool(jnp.allclose(embeds_p, embeds_r, rtol=2e-2, atol=2e-2))

    print("KERNEL_OK")
</pallas_src>

<mosaic_0001>
module attributes {stable_mosaic.version = 11 : i64} {
  func.func @_gcn_kernel(%arg0: i32, %arg1: i32, %arg2: i32, %arg3: memref<1x1xi32, #tpu.memory_space<smem>>, %arg4: memref<1xi32, #tpu.memory_space<smem>>, %arg5: memref<96x128xbf16, #tpu.memory_space<vmem>>, %arg6: memref<128x128xbf16, #tpu.memory_space<vmem>>, %arg7: memref<96x128xf32, #tpu.memory_space<vmem>>, %arg8: memref<96x128xf32, #tpu.memory_space<vmem>>) attributes {dimension_semantics = [#tpu.dimension_semantics<parallel>, #tpu.dimension_semantics<parallel>, #tpu.dimension_semantics<arbitrary>], iteration_bounds = array<i64: 1, 1, 1>, scalar_prefetch = 2 : i64, scratch_operands = 1 : i64, tpu.core_type = #tpu.core_type<tc>, window_params = [{transform_indices = @transform_0, window_bounds = array<i64: 96, 128>}, {transform_indices = @transform_1, window_bounds = array<i64: 128, 128>}, {transform_indices = @transform_2, window_bounds = array<i64: 96, 128>}]} {
    %c0_i32 = arith.constant 0 : i32
    %0 = arith.cmpi eq, %arg2, %c0_i32 : i32
    %1 = arith.extui %0 : i1 to i32
    %c0_i32_0 = arith.constant 0 : i32
    %2 = arith.cmpi ne, %1, %c0_i32_0 : i32
    scf.if %2 {
      %cst = arith.constant 0.000000e+00 : f32
      %11 = vector.broadcast %cst : f32 to vector<96x128xf32>
      %c0 = arith.constant 0 : index
      %c0_4 = arith.constant 0 : index
      %12 = vector.load %arg8[%c0, %c0_4] : memref<96x128xf32, #tpu.memory_space<vmem>>, vector<96x128xf32>
      tpu.vector_store %arg8[%c0, %c0_4], %11 {strides = array<i32>} : memref<96x128xf32, #tpu.memory_space<vmem>>, vector<96x128xf32>,
    } else {
    }
    %3 = arith.index_cast %arg0 : i32 to index
    %4 = memref.load %arg4[%3] : memref<1xi32, #tpu.memory_space<smem>>
    %5 = arith.cmpi slt, %arg2, %4 : i32
    %6 = arith.extui %5 : i1 to i32
    %c0_i32_1 = arith.constant 0 : i32
    %7 = arith.cmpi ne, %6, %c0_i32_1 : i32
    scf.if %7 {
      %c0 = arith.constant 0 : index
      %c0_4 = arith.constant 0 : index
      %11 = vector.load %arg8[%c0, %c0_4] : memref<96x128xf32, #tpu.memory_space<vmem>>, vector<96x128xf32>
      %c0_5 = arith.constant 0 : index
      %c0_6 = arith.constant 0 : index
      %12 = vector.load %arg5[%c0_5, %c0_6] : memref<96x128xbf16, #tpu.memory_space<vmem>>, vector<96x128xbf16>
      %c0_7 = arith.constant 0 : index
      %c0_8 = arith.constant 0 : index
      %13 = vector.load %arg6[%c0_7, %c0_8] : memref<128x128xbf16, #tpu.memory_space<vmem>>, vector<128x128xbf16>
      %cst = arith.constant dense<0.000000e+00> : vector<96x128xf32>
      %14 = tpu.matmul %12, %13, %cst {dimension_numbers = #tpu.dot_dimension_numbers<[1], [0], [0], [1], [0, 0, 1, 1], [], []>} : vector<96x128xbf16>, vector<128x128xbf16>, vector<96x128xf32> -> vector<96x128xf32>
      %15 = arith.addf %11, %14 : vector<96x128xf32>
      %c0_9 = arith.constant 0 : index
      %c0_10 = arith.constant 0 : index
      %16 = vector.load %arg8[%c0_9, %c0_10] : memref<96x128xf32, #tpu.memory_space<vmem>>, vector<96x128xf32>
      tpu.vector_store %arg8[%c0_9, %c0_10], %15 {strides = array<i32>} : memref<96x128xf32, #tpu.memory_space<vmem>>, vector<96x128xf32>,
    } else {
    }
    %c0_i32_2 = arith.constant 0 : i32
    %8 = arith.cmpi eq, %arg2, %c0_i32_2 : i32
    %9 = arith.extui %8 : i1 to i32
    %c0_i32_3 = arith.constant 0 : i32
    %10 = arith.cmpi ne, %9, %c0_i32_3 : i32
    scf.if %10 {
      %c0 = arith.constant 0 : index
      %c0_4 = arith.constant 0 : index
      %11 = vector.load %arg8[%c0, %c0_4] : memref<96x128xf32, #tpu.memory_space<vmem>>, vector<96x128xf32>
      %cst = arith.constant 0.000000e+00 : f32
      %12 = vector.broadcast %cst : f32 to vector<96x128xf32>
      %13 = arith.cmpf oge, %11, %12 : vector<96x128xf32>
      %cst_5 = arith.constant 5.000000e-01 : f32
      %14 = vector.broadcast %cst_5 : f32 to vector<96x128xf32>
      %15 = arith.mulf %14, %11 : vector<96x128xf32>
      %16 = arith.select %13, %11, %15 : vector<96x128xi1>, vector<96x128xf32>
      %c0_6 = arith.constant 0 : index
      %c0_7 = arith.constant 0 : index
      %17 = vector.load %arg7[%c0_6, %c0_7] : memref<96x128xf32, #tpu.memory_space<vmem>>, vector<96x128xf32>
      tpu.vector_store %arg7[%c0_6, %c0_7], %16 {strides = array<i32>} : memref<96x128xf32, #tpu.memory_space<vmem>>, vector<96x128xf32>,
    } else {
    }
    return
  }
  func.func @transform_0(%arg0: i32, %arg1: i32, %arg2: i32, %arg3: memref<1x1xi32, #tpu.memory_space<smem>>, %arg4: memref<1xi32, #tpu.memory_space<smem>>) -> (i32, i32) {
    %0 = arith.index_cast %arg0 : i32 to index
    %1 = arith.index_cast %arg2 : i32 to index
    %2 = memref.load %arg3[%0, %1] : memref<1x1xi32, #tpu.memory_space<smem>>
    %c0_i32 = arith.constant 0 : i32
    return %arg0, %2 : i32, i32
  }
  func.func @transform_1(%arg0: i32, %arg1: i32, %arg2: i32, %arg3: memref<1x1xi32, #tpu.memory_space<smem>>, %arg4: memref<1xi32, #tpu.memory_space<smem>>) -> (i32, i32) {
    %0 = arith.index_cast %arg0 : i32 to index
    %1 = arith.index_cast %arg2 : i32 to index
    %2 = memref.load %arg3[%0, %1] : memref<1x1xi32, #tpu.memory_space<smem>>
    %c0_i32 = arith.constant 0 : i32
    return %2, %arg1 : i32, i32
  }
  func.func @transform_2(%arg0: i32, %arg1: i32, %arg2: i32, %arg3: memref<1x1xi32, #tpu.memory_space<smem>>, %arg4: memref<1xi32, #tpu.memory_space<smem>>) -> (i32, i32) {
    %c0_i32 = arith.constant 0 : i32
    return %arg0, %arg1 : i32, i32
  }
}

</mosaic_0001>

<llo_original>
// kernel: tpu_custom_call.1
$region0: #{tpu_custom_call.1}
  #allocation0 [shape = 'u32[]', space=smem, size = 0x4, offset = 0x4, fixed_abs, tag = 'smem constant byte address 0x4 - core index']
  #allocation1 [shape = 'u32[144,128]{1,0:T(1,128)}', space=vmem, size = 0x12000, scoped, tag = 'internal scratch']
  #allocation2 [shape = 'f32[96,128]{1,0:T(8,128)}', space=vmem, size = 0xc000, scoped, tag = 'scratch operand']
  #allocation3 [shape = 's32[1]{0}', space=sflag, size = 0x4, scoped, tag = 'scoped memory for tpu_custom_call.1']
  #allocation4 [shape = 's32[1,1]{1,0:T(1,128)S(6)}', space=smem, size = 0x200, scoped, tag = 'prefetched SMEM operand 0']
  #allocation5 [shape = 's32[1]{0:T(128)S(6)}', space=smem, size = 0x200, scoped, tag = 'prefetched SMEM operand 1']
  %s0 = inlined_call_operand.<no memory space> [shape: s32[1,1], index: 0, kind: input, shape index: {}]
  %s1 = inlined_call_operand.<no memory space> [shape: s32[1], index: 1, kind: input, shape index: {}]
  %s2 = inlined_call_operand.hbm [shape: bf16[96,128], index: 2, kind: input, shape index: {}]
  %s3 = inlined_call_operand.hbm [shape: bf16[128,128], index: 3, kind: input, shape index: {}]
  %s4 = inlined_call_operand.hbm [shape: f32[96,128], index: 4, kind: output, shape index: {}]
  %s5 = sld [smem:[#allocation0]]
  $region38: #{tpu_custom_call.1} parent=0
    _
  %s7 = ssub.s32 1, %s5
  %s8 = scalar_select 0, %s7, %s5
  %9 = sst [smem:[#allocation4]] %s0
  %10 = sst [smem:[#allocation5]] %s1
  $region1: #{tpu_custom_call.1} parent=0
    #allocation6 [shape = 'u8[24576]{0}', space=vmem, size = 0x6000, scoped, tag = 'input window, operand 2, single buffered']
    #allocation7 [shape = 's32[1]{0}', space=sflag, size = 0x4, scoped, tag = 'scoped memory for tpu_custom_call.1']
    #allocation8 [shape = 's32[1]{0}', space=sflag, size = 0x4, scoped, tag = 'scoped memory for tpu_custom_call.1']
    #allocation9 [shape = 'u8[32768]{0}', space=vmem, size = 0x8000, scoped, tag = 'input window, operand 3, single buffered']
    #allocation10 [shape = 's32[1]{0}', space=sflag, size = 0x4, scoped, tag = 'scoped memory for tpu_custom_call.1']
    #allocation11 [shape = 'u8[49152]{0}', space=vmem, size = 0xc000, scoped, tag = 'output window, operand 0, single buffered']
    %11 = vsyncpa [#allocation7], 0
    %12 = vsyncpa [#allocation10], 0
    %13 = vsyncpa [#allocation8], 0
    // Predicated region
    $region2: #{tpu_custom_call.1} parent=1 // pred_check
      _
    $region3: #{tpu_custom_call.1} parent=1 // pred_check_branch
      %15 = sbr.rel (0) target = $region5
    $region4: #{tpu_custom_call.1} parent=1 // pred_region
      %s16 = sadd.s32 0, 0
      %s17 = smul.u32 %s16, 128
      %s18 = sadd.s32 %s17, 0
      %s19 = sld [smem:[#allocation4 + %s18]]
      %s21 = ssub.s32 768, 768
      %22 = vsyncadd [#allocation7], %s21
      %s23 = smul.addr %s19, 64
      %s24 = scalar_lea.hbm %s2, %s23
      %s25 = sshll.u32 [#allocation6], 4
      %s26 = int_to_ptr.vmem [resolvable:$true] %s25
      %31 = dma.hbm_to_vmem [thread:$0]  %s24, 768, %s26, [#allocation7], 64, 64, 4
    $region5: #{tpu_custom_call.1} parent=1 // pred_fallthru
      _
    // Predicated region
    $region6: #{tpu_custom_call.1} parent=1 // pred_check
      _
    $region7: #{tpu_custom_call.1} parent=1 // pred_check_branch
      %33 = sbr.rel (0) target = $region9
    $region8: #{tpu_custom_call.1} parent=1 // pred_region
      %s34 = sadd.s32 0, 0
      %s35 = smul.u32 %s34, 128
      %s36 = sadd.s32 %s35, 0
      %s37 = sld [smem:[#allocation4 + %s36]]
      %s38 = smul.u32 16, %s37
      %s40 = ssub.s32 1024, 1024
      %41 = vsyncadd [#allocation10], %s40
      %s42 = smul.addr %s38, 64
      %s43 = scalar_lea.hbm %s3, %s42
      %s44 = sshll.u32 [#allocation9], 4
      %s45 = int_to_ptr.vmem [resolvable:$true] %s44
      %50 = dma.hbm_to_vmem [thread:$0]  %s43, 1024, %s45, [#allocation10], 64, 64, 4
    $region9: #{tpu_custom_call.1} parent=1 // pred_fallthru
      _
    // Predicated region
    $region10: #{tpu_custom_call.1} parent=1 // pred_check
      _
    $region11: #{tpu_custom_call.1} parent=1 // pred_check_branch
      %52 = sbr.rel (0) target = $region13
    $region12: #{tpu_custom_call.1} parent=1 // pred_region
      %53 = dma.done [#allocation7], 768
    $region13: #{tpu_custom_call.1} parent=1 // pred_fallthru
      _
    // Predicated region
    $region14: #{tpu_custom_call.1} parent=1 // pred_check
      _
    $region15: #{tpu_custom_call.1} parent=1 // pred_check_branch
      %55 = sbr.rel (0) target = $region17
    $region16: #{tpu_custom_call.1} parent=1 // pred_region
      %56 = dma.done [#allocation10], 1024
    $region17: #{tpu_custom_call.1} parent=1 // pred_fallthru
      _
    %s57 = sadd.s32 0, 0
    %s58 = smul.u32 %s57, 128
    %s59 = sadd.s32 %s58, 0
    %s60 = sld [smem:[#allocation4 + %s59]]
    %s61 = sadd.s32 0, 0
    %s62 = smul.u32 %s61, 128
    %s63 = sadd.s32 %s62, 0
    %s64 = sld [smem:[#allocation4 + %s63]]
    %s65 = smul.u32 16, %s64
    %p67 = scmp.eq.s32.totalorder 0, 0
    // Predicated region
    $region18: #{tpu_custom_call.1} parent=1 // pred_check
      %p68 = pneg %p67
    $region19: #{tpu_custom_call.1} parent=1 // pred_check_branch
      %70 = sbr.rel (%p68) target = $region21
    $region20: #{tpu_custom_call.1} parent=1 // pred_region
      %71 = vst [vmem:[#allocation2] sm:$0xff] 0.0
      %72 = vst [vmem:[#allocation2 + $0x8] sm:$0xff] 0.0
      %73 = vst [vmem:[#allocation2 + $0x10] sm:$0xff] 0.0
      %74 = vst [vmem:[#allocation2 + $0x18] sm:$0xff] 0.0
      %75 = vst [vmem:[#allocation2 + $0x20] sm:$0xff] 0.0
      %76 = vst [vmem:[#allocation2 + $0x28] sm:$0xff] 0.0
      %77 = vst [vmem:[#allocation2 + $0x30] sm:$0xff] 0.0
      %78 = vst [vmem:[#allocation2 + $0x38] sm:$0xff] 0.0
      %79 = vst [vmem:[#allocation2 + $0x40] sm:$0xff] 0.0
      %80 = vst [vmem:[#allocation2 + $0x48] sm:$0xff] 0.0
      %81 = vst [vmem:[#allocation2 + $0x50] sm:$0xff] 0.0
      %82 = vst [vmem:[#allocation2 + $0x58] sm:$0xff] 0.0
    $region21: #{tpu_custom_call.1} parent=1 // pred_fallthru
      _
    %s83 = sld [smem:[#allocation5]]
    %p84 = scmp.lt.s32.totalorder 0, %s83
    // Predicated region
    $region22: #{tpu_custom_call.1} parent=1 // pred_check
      %p85 = pneg %p84
    $region23: #{tpu_custom_call.1} parent=1 // pred_check_branch
      %87 = sbr.rel (%p85) target = $region25
    $region24: #{tpu_custom_call.1} parent=1 // pred_region
      %v88 = vld [vmem:[#allocation2] sm:$0xff]
      %v89 = vld [vmem:[#allocation2 + $0x8] sm:$0xff]
      %v90 = vld [vmem:[#allocation2 + $0x10] sm:$0xff]
      %v91 = vld [vmem:[#allocation2 + $0x18] sm:$0xff]
      %v92 = vld [vmem:[#allocation2 + $0x20] sm:$0xff]
      %v93 = vld [vmem:[#allocation2 + $0x28] sm:$0xff]
      %v94 = vld [vmem:[#allocation2 + $0x30] sm:$0xff]
      %v95 = vld [vmem:[#allocation2 + $0x38] sm:$0xff]
      %v96 = vld [vmem:[#allocation2 + $0x40] sm:$0xff]
      %v97 = vld [vmem:[#allocation2 + $0x48] sm:$0xff]
      %v98 = vld [vmem:[#allocation2 + $0x50] sm:$0xff]
      %v99 = vld [vmem:[#allocation2 + $0x58] sm:$0xff]
      %v100 = vld [vmem:[#allocation6] sm:$0xf]
      %v101 = vld [vmem:[#allocation6 + $0x4] sm:$0xf]
      %v102 = vld [vmem:[#allocation6 + $0x8] sm:$0xf]
      %v103 = vld [vmem:[#allocation6 + $0xc] sm:$0xf]
      %v104 = vld [vmem:[#allocation6 + $0x10] sm:$0xf]
      %v105 = vld [vmem:[#allocation6 + $0x14] sm:$0xf]
      %v106 = vld [vmem:[#allocation6 + $0x18] sm:$0xf]
      %v107 = vld [vmem:[#allocation6 + $0x1c] sm:$0xf]
      %v108 = vld [vmem:[#allocation6 + $0x20] sm:$0xf]
      %v109 = vld [vmem:[#allocation6 + $0x24] sm:$0xf]
      %v110 = vld [vmem:[#allocation6 + $0x28] sm:$0xf]
      %v111 = vld [vmem:[#allocation6 + $0x2c] sm:$0xf]
      %v112 = vld [vmem:[#allocation9] sm:$0xf]
      %v113 = vld [vmem:[#allocation9 + $0x4] sm:$0xf]
      %v114 = vld [vmem:[#allocation9 + $0x8] sm:$0xf]
      %v115 = vld [vmem:[#allocation9 + $0xc] sm:$0xf]
      %v116 = vld [vmem:[#allocation9 + $0x10] sm:$0xf]
      %v117 = vld [vmem:[#allocation9 + $0x14] sm:$0xf]
      %v118 = vld [vmem:[#allocation9 + $0x18] sm:$0xf]
      %v119 = vld [vmem:[#allocation9 + $0x1c] sm:$0xf]
      %v120 = vld [vmem:[#allocation9 + $0x20] sm:$0xf]
      %v121 = vld [vmem:[#allocation9 + $0x24] sm:$0xf]
      %v122 = vld [vmem:[#allocation9 + $0x28] sm:$0xf]
      %v123 = vld [vmem:[#allocation9 + $0x2c] sm:$0xf]
      %v124 = vld [vmem:[#allocation9 + $0x30] sm:$0xf]
      %v125 = vld [vmem:[#allocation9 + $0x34] sm:$0xf]
      %v126 = vld [vmem:[#allocation9 + $0x38] sm:$0xf]
      %v127 = vld [vmem:[#allocation9 + $0x3c] sm:$0xf]
      %v140 = vunpack.c.l.b16 %v100
      %v141 = vunpack.c.l.b16 %v101
      %v142 = vunpack.c.l.b16 %v102
      %v143 = vunpack.c.l.b16 %v103
      %v144 = vunpack.c.l.b16 %v104
      %v145 = vunpack.c.l.b16 %v105
      %v146 = vunpack.c.l.b16 %v106
      %v147 = vunpack.c.l.b16 %v107
      %v148 = vunpack.c.l.b16 %v108
      %v149 = vunpack.c.l.b16 %v109
      %v150 = vunpack.c.l.b16 %v110
      %v151 = vunpack.c.l.b16 %v111
      %v152 = vpack.c.b16 %v141, %v140
      %v153 = vpack.c.b16 %v143, %v142
      %v154 = vpack.c.b16 %v145, %v144
      %v155 = vpack.c.b16 %v147, %v146
      %v156 = vpack.c.b16 %v149, %v148
      %v157 = vpack.c.b16 %v151, %v150
      %v180 = vunpack.c.l.b16 %v112
      %v181 = vunpack.c.l.b16 %v113
      %v182 = vunpack.c.l.b16 %v114
      %v183 = vunpack.c.l.b16 %v115
      %v184 = vunpack.c.l.b16 %v116
      %v185 = vunpack.c.l.b16 %v117
      %v186 = vunpack.c.l.b16 %v118
      %v187 = vunpack.c.l.b16 %v119
      %v188 = vunpack.c.l.b16 %v120
      %v189 = vunpack.c.l.b16 %v121
      %v190 = vunpack.c.l.b16 %v122
      %v191 = vunpack.c.l.b16 %v123
      %v192 = vunpack.c.l.b16 %v124
      %v193 = vunpack.c.l.b16 %v125
      %v194 = vunpack.c.l.b16 %v126
      %v195 = vunpack.c.l.b16 %v127
      %v196 = vpack.c.b16 %v181, %v180
      %v197 = vpack.c.b16 %v183, %v182
      %v198 = vpack.c.b16 %v185, %v184
      %v199 = vpack.c.b16 %v187, %v186
      %v200 = vpack.c.b16 %v189, %v188
      %v201 = vpack.c.b16 %v191, %v190
      %v202 = vpack.c.b16 %v193, %v192
      %v203 = vpack.c.b16 %v195, %v194
      %212 = vmatprep.subr.bf16.mxu0 0
      %213 = vmatpush1.bf16.msra.mxu0 %v196
      %214 = vmatprep.subr.bf16.mxu0 0
      %215 = vmatpush1.bf16.msra.mxu0 %v197
      %216 = vmatprep.subr.bf16.mxu0 0
      %217 = vmatpush1.bf16.msra.mxu0 %v198
      %218 = vmatprep.subr.bf16.mxu0 0
      %219 = vmatpush1.bf16.msra.mxu0 %v199
      %220 = vmatprep.subr.bf16.mxu0 0
      %221 = vmatpush1.bf16.msra.mxu0 %v200
      %222 = vmatprep.subr.bf16.mxu0 0
      %223 = vmatpush1.bf16.msra.mxu0 %v201
      %224 = vmatprep.subr.bf16.mxu0 0
      %225 = vmatpush1.bf16.msra.mxu0 %v202
      %226 = vmatprep.subr.bf16.mxu0 0
      %227 = vmatpush1.bf16.msra.mxu0 %v203
      %228 = vmatprep.subr.bf16.mxu0 0
      %229 = vmatpush1.bf16.msra.mxu0 0
      %230 = vmatprep.subr.bf16.mxu0 0
      %231 = vmatpush1.bf16.msra.mxu0 0
      %232 = vmatprep.subr.bf16.mxu0 0
      %233 = vmatpush1.bf16.msra.mxu0 0
      %234 = vmatprep.subr.bf16.mxu0 0
      %235 = vmatpush1.bf16.msra.mxu0 0
      %236 = vmatprep.subr.bf16.mxu0 0
      %237 = vmatpush1.bf16.msra.mxu0 0
      %238 = vmatprep.subr.bf16.mxu0 0
      %239 = vmatpush1.bf16.msra.mxu0 0
      %240 = vmatprep.subr.bf16.mxu0 0
      %241 = vmatpush1.bf16.msra.mxu0 0
      %242 = vmatprep.subr.bf16.mxu0 0
      %243 = vmatpush1.bf16.msra.mxu0 0
      %244 = vmatprep.mubr.bf16.mxu0 0
      %245 = vmatmul.mubr.bf16.gmra.mrb[0].mxu0 %v152
      %v246 = vpop.f32.mrb[0].mxu0
      %v247 = vadd.f32 0.0, %v246
      %v248 = vpop.f32.mrb[0].mxu0
      %v249 = vpop.f32.mrb[0].mxu0
      %v250 = vadd.f32 0.0, %v249
      %v251 = vpop.f32.mrb[0].mxu0
      %252 = vmatprep.mubr.bf16.mxu0 0
      %253 = vmatmul.mubr.bf16.gmra.mrb[0].mxu0 %v153
      %v254 = vpop.f32.mrb[0].mxu0
      %v255 = vadd.f32 0.0, %v254
      %v256 = vpop.f32.mrb[0].mxu0
      %v257 = vpop.f32.mrb[0].mxu0
      %v258 = vadd.f32 0.0, %v257
      %v259 = vpop.f32.mrb[0].mxu0
      %260 = vmatprep.mubr.bf16.mxu0 0
      %261 = vmatmul.mubr.bf16.gmra.mrb[0].mxu0 %v154
      %v262 = vpop.f32.mrb[0].mxu0
      %v263 = vadd.f32 0.0, %v262
      %v264 = vpop.f32.mrb[0].mxu0
      %v265 = vpop.f32.mrb[0].mxu0
      %v266 = vadd.f32 0.0, %v265
      %v267 = vpop.f32.mrb[0].mxu0
      %268 = vmatprep.mubr.bf16.mxu0 0
      %269 = vmatmul.mubr.bf16.gmra.mrb[0].mxu0 %v155
      %v270 = vpop.f32.mrb[0].mxu0
      %v271 = vadd.f32 0.0, %v270
      %v272 = vpop.f32.mrb[0].mxu0
      %v273 = vpop.f32.mrb[0].mxu0
      %v274 = vadd.f32 0.0, %v273
      %v275 = vpop.f32.mrb[0].mxu0
      %276 = vmatprep.mubr.bf16.mxu0 0
      %277 = vmatmul.mubr.bf16.gmra.mrb[0].mxu0 %v156
      %v278 = vpop.f32.mrb[0].mxu0
      %v279 = vadd.f32 0.0, %v278
      %v280 = vpop.f32.mrb[0].mxu0
      %v281 = vpop.f32.mrb[0].mxu0
      %v282 = vadd.f32 0.0, %v281
      %v283 = vpop.f32.mrb[0].mxu0
      %284 = vmatprep.mubr.bf16.mxu0 0
      %285 = vmatmul.mubr.bf16.gmra.mrb[0].mxu0 %v157
      %v286 = vpop.f32.mrb[0].mxu0
      %v287 = vadd.f32 0.0, %v286
      %v288 = vpop.f32.mrb[0].mxu0
      %v289 = vpop.f32.mrb[0].mxu0
      %v290 = vadd.f32 0.0, %v289
      %v291 = vpop.f32.mrb[0].mxu0
      %292 = vdwg.mxu0
      %v293 = vadd.f32 %v88, %v247
      %v294 = vadd.f32 %v89, %v250
      %v295 = vadd.f32 %v90, %v255
      %v296 = vadd.f32 %v91, %v258
      %v297 = vadd.f32 %v92, %v263
      %v298 = vadd.f32 %v93, %v266
      %v299 = vadd.f32 %v94, %v271
      %v300 = vadd.f32 %v95, %v274
      %v301 = vadd.f32 %v96, %v279
      %v302 = vadd.f32 %v97, %v282
      %v303 = vadd.f32 %v98, %v287
      %v304 = vadd.f32 %v99, %v290
      %305 = vst [vmem:[#allocation2] sm:$0xff] %v293
      %306 = vst [vmem:[#allocation2 + $0x8] sm:$0xff] %v294
      %307 = vst [vmem:[#allocation2 + $0x10] sm:$0xff] %v295
      %308 = vst [vmem:[#allocation2 + $0x18] sm:$0xff] %v296
      %309 = vst [vmem:[#allocation2 + $0x20] sm:$0xff] %v297
      %310 = vst [vmem:[#allocation2 + $0x28] sm:$0xff] %v298
      %311 = vst [vmem:[#allocation2 + $0x30] sm:$0xff] %v299
      %312 = vst [vmem:[#allocation2 + $0x38] sm:$0xff] %v300
      %313 = vst [vmem:[#allocation2 + $0x40] sm:$0xff] %v301
      %314 = vst [vmem:[#allocation2 + $0x48] sm:$0xff] %v302
      %315 = vst [vmem:[#allocation2 + $0x50] sm:$0xff] %v303
      %316 = vst [vmem:[#allocation2 + $0x58] sm:$0xff] %v304
    $region25: #{tpu_custom_call.1} parent=1 // pred_fallthru
      _
    // Predicated region
    $region26: #{tpu_custom_call.1} parent=1 // pred_check
      %p317 = pneg %p67
    $region27: #{tpu_custom_call.1} parent=1 // pred_check_branch
      %319 = sbr.rel (%p317) target = $region29
    $region28: #{tpu_custom_call.1} parent=1 // pred_region
      %v320 = vld [vmem:[#allocation2] sm:$0xff]
      %v321 = vld [vmem:[#allocation2 + $0x8] sm:$0xff]
      %v322 = vld [vmem:[#allocation2 + $0x10] sm:$0xff]
      %v323 = vld [vmem:[#allocation2 + $0x18] sm:$0xff]
      %v324 = vld [vmem:[#allocation2 + $0x20] sm:$0xff]
      %v325 = vld [vmem:[#allocation2 + $0x28] sm:$0xff]
      %v326 = vld [vmem:[#allocation2 + $0x30] sm:$0xff]
      %v327 = vld [vmem:[#allocation2 + $0x38] sm:$0xff]
      %v328 = vld [vmem:[#allocation2 + $0x40] sm:$0xff]
      %v329 = vld [vmem:[#allocation2 + $0x48] sm:$0xff]
      %v330 = vld [vmem:[#allocation2 + $0x50] sm:$0xff]
      %v331 = vld [vmem:[#allocation2 + $0x58] sm:$0xff]
      %vm332 = vcmp.ge.f32.partialorder %v320, 0.0
      %vm333 = vcmp.ge.f32.partialorder %v321, 0.0
      %vm334 = vcmp.ge.f32.partialorder %v322, 0.0
      %vm335 = vcmp.ge.f32.partialorder %v323, 0.0
      %vm336 = vcmp.ge.f32.partialorder %v324, 0.0
      %vm337 = vcmp.ge.f32.partialorder %v325, 0.0
      %vm338 = vcmp.ge.f32.partialorder %v326, 0.0
      %vm339 = vcmp.ge.f32.partialorder %v327, 0.0
      %vm340 = vcmp.ge.f32.partialorder %v328, 0.0
      %vm341 = vcmp.ge.f32.partialorder %v329, 0.0
      %vm342 = vcmp.ge.f32.partialorder %v330, 0.0
      %vm343 = vcmp.ge.f32.partialorder %v331, 0.0
      %v344 = vmul.f32 %v320, 0.5
      %v345 = vmul.f32 %v321, 0.5
      %v346 = vmul.f32 %v322, 0.5
      %v347 = vmul.f32 %v323, 0.5
      %v348 = vmul.f32 %v324, 0.5
      %v349 = vmul.f32 %v325, 0.5
      %v350 = vmul.f32 %v326, 0.5
      %v351 = vmul.f32 %v327, 0.5
      %v352 = vmul.f32 %v328, 0.5
      %v353 = vmul.f32 %v329, 0.5
      %v354 = vmul.f32 %v330, 0.5
      %v355 = vmul.f32 %v331, 0.5
      %v356 = vsel %vm332, %v320, %v344
      %v357 = vsel %vm333, %v321, %v345
      %v358 = vsel %vm334, %v322, %v346
      %v359 = vsel %vm335, %v323, %v347
      %v360 = vsel %vm336, %v324, %v348
      %v361 = vsel %vm337, %v325, %v349
      %v362 = vsel %vm338, %v326, %v350
      %v363 = vsel %vm339, %v327, %v351
      %v364 = vsel %vm340, %v328, %v352
      %v365 = vsel %vm341, %v329, %v353
      %v366 = vsel %vm342, %v330, %v354
      %v367 = vsel %vm343, %v331, %v355
      %368 = vst [vmem:[#allocation11] sm:$0xff] %v356
      %369 = vst [vmem:[#allocation11 + $0x8] sm:$0xff] %v357
      %370 = vst [vmem:[#allocation11 + $0x10] sm:$0xff] %v358
      %371 = vst [vmem:[#allocation11 + $0x18] sm:$0xff] %v359
      %372 = vst [vmem:[#allocation11 + $0x20] sm:$0xff] %v360
      %373 = vst [vmem:[#allocation11 + $0x28] sm:$0xff] %v361
      %374 = vst [vmem:[#allocation11 + $0x30] sm:$0xff] %v362
      %375 = vst [vmem:[#allocation11 + $0x38] sm:$0xff] %v363
      %376 = vst [vmem:[#allocation11 + $0x40] sm:$0xff] %v364
      %377 = vst [vmem:[#allocation11 + $0x48] sm:$0xff] %v365
      %378 = vst [vmem:[#allocation11 + $0x50] sm:$0xff] %v366
      %379 = vst [vmem:[#allocation11 + $0x58] sm:$0xff] %v367
    $region29: #{tpu_custom_call.1} parent=1 // pred_fallthru
      _
    // Predicated region
    $region30: #{tpu_custom_call.1} parent=1 // pred_check
      _
    $region31: #{tpu_custom_call.1} parent=1 // pred_check_branch
      %381 = sbr.rel (0) target = $region33
    $region32: #{tpu_custom_call.1} parent=1 // pred_region
      %s383 = ssub.s32 1536, 1536
      %384 = vsyncadd [#allocation8], %s383
      %s385 = sshll.u32 [#allocation11], 4
      %s386 = int_to_ptr.vmem [resolvable:$true] %s385
      %391 = dma.vmem_to_hbm [thread:$0]  %s386, 1536, %s4, [#allocation8], 128, 128, 8
    $region33: #{tpu_custom_call.1} parent=1 // pred_fallthru
      _
    // Predicated region
    $region34: #{tpu_custom_call.1} parent=1 // pred_check
      _
    $region35: #{tpu_custom_call.1} parent=1 // pred_check_branch
      %393 = sbr.rel (0) target = $region37
    $region36: #{tpu_custom_call.1} parent=1 // pred_region
      %394 = dma.done [#allocation8], 1536
    $region37: #{tpu_custom_call.1} parent=1 // pred_fallthru
      _
    %395 = vsyncpa [#allocation7], 1
    %396 = vsyncpa [#allocation10], 1
    %397 = vsyncpa [#allocation8], 1

</llo_original>
